<compile_context>
chip_gen: v6e
topology: v6e:2x2x1
jax: 0.10.0
libtpu: 0.0.40
codegen_flags: <defaults>
</compile_context>

<pallas_src>
import functools

import jax
import jax.numpy as jnp
from jax.experimental import pallas as pl
from jax.experimental.pallas import tpu as pltpu


def _ce_label_smooth_kernel(x_ref, tgt_ref, loss_ref, *, epsilon, num_classes):
    x = x_ref[...].astype(jnp.float32)                 # (tn, C); cast in-vreg
    tn, c = x.shape

    # Numerically stable log-softmax pieces (exact f32 reductions, no MXU).
    m = jnp.max(x, axis=1, keepdims=True)              # (tn, 1)
    shifted = x - m
    lse = jnp.log(jnp.sum(jnp.exp(shifted), axis=1, keepdims=True))

    # Fused smoothing weights: w_c = eps/C + (1-eps) * [c == tgt].
    tgt = tgt_ref[...]                                 # (tn, 1) int32
    class_ids = jax.lax.broadcasted_iota(jnp.int32, (tn, c), 1)
    off = jnp.float32(epsilon / num_classes)
    on = jnp.float32(1.0 - epsilon) + off
    w = jnp.where(class_ids == tgt, on, off)

    # Per-row loss in ONE weighted pass (sum_c w_c == 1).
    loss_ref[...] = lse - jnp.sum(shifted * w, axis=1, keepdims=True)


def _vmem_limit_bytes():
    """Generation-aware VMEM limit (~0.7x physical; conservative fallback)."""
    try:
        cap = pltpu.get_tpu_info().vmem_capacity_bytes
    except Exception:
        cap = 64 << 20          # v7x per-TC capacity: safe lower bound
    return int(0.7 * cap)


def _pick_tile_n(n, c, itemsize, vmem_limit_bytes, cap=8192):
    """Batch-tile so double-buffered native-dtype logits PLUS the ~6x (tn, C)
    f32 temporaries the body materializes fit comfortably in VMEM, keeping the
    block sublane-packed (8 rows for f32, 16 for bf16, 32 for 8-bit)."""
    pack = 8 * max(1, 4 // max(1, itemsize))
    if n <= pack:
        return int(n)                                   # full-dim block is legal
    # per-row footprint: 2x double-buffered input + ~6 f32 temps + out/tgt cols
    bytes_per_row = c * (2 * itemsize + 6 * 4) + 16
    budget = int(0.6 * vmem_limit_bytes)                # leave pipelining headroom
    t = max(1, budget // bytes_per_row)
    t = min(t, cap, n)
    t = max(pack, (t // pack) * pack)
    # TODO(synk): for C so large that even `pack` rows blow the budget, tile the
    # class dimension (two-pass / online log-softmax) instead of shrinking rows.
    return int(t)


def cross_entropy_label_smooth(x, targets, *, num_classes, epsilon, tile_n=None):
    """x: (N, num_classes) float logits (any float dtype, NOT upcast on host);
    targets: (N,) integer class indices. Returns the scalar f32 loss."""
    n, c = x.shape
    assert c == num_classes
    tgt2d = targets.reshape(n, 1).astype(jnp.int32)

    vmem_limit = _vmem_limit_bytes()
    if tile_n is None:
        tile_n = _pick_tile_n(n, c, x.dtype.itemsize, vmem_limit)
    tile_n = int(tile_n)
    grid = (pl.cdiv(n, tile_n),)

    kernel = functools.partial(
        _ce_label_smooth_kernel,
        epsilon=float(epsilon),
        num_classes=int(num_classes),
    )
    cost = pl.CostEstimate(
        flops=8 * n * c,
        transcendentals=n * c,
        bytes_accessed=n * c * x.dtype.itemsize + n * 4 + n * 4,
    )

    row_losses = pl.pallas_call(
        kernel,
        out_shape=jax.ShapeDtypeStruct((n, 1), jnp.float32),
        grid_spec=pltpu.PrefetchScalarGridSpec(
            num_scalar_prefetch=0,
            grid=grid,
            in_specs=[
                pl.BlockSpec((tile_n, c), lambda i: (i, 0)),
                pl.BlockSpec((tile_n, 1), lambda i: (i, 0)),
            ],
            out_specs=pl.BlockSpec((tile_n, 1), lambda i: (i, 0)),
        ),
        compiler_params=pltpu.CompilerParams(
            dimension_semantics=("parallel",),   # independent tiles -> megacore on v7x
            vmem_limit_bytes=vmem_limit,
        ),
        cost_estimate=cost,
    )(x, tgt2d)

    # mean over batch then sum over classes == sum(per-row losses) / TRUE N.
    return jnp.sum(row_losses) / jnp.float32(n)


if __name__ == "__main__":
    # Module "parameters" from __init__: num_classes, epsilon (no learned weights).
    NUM_CLASSES = 128
    EPSILON = 0.1
    BATCH = 40          # not a multiple of the explicit tile -> exercises ragged last block
    TILE_N = 16         # small explicit tile so the demo runs a multi-step grid

    key = jax.random.PRNGKey(0)
    k_logits, k_tgt = jax.random.split(key)
    logits = jax.random.normal(
        k_logits, (BATCH, NUM_CLASSES), dtype=jnp.float32).astype(jnp.bfloat16)
    targets = jax.random.randint(k_tgt, (BATCH,), 0, NUM_CLASSES, dtype=jnp.int32)

    # Pure-JAX reference (same f32 math applied to the same bf16 inputs).
    xf = logits.astype(jnp.float32)
    log_probs = jax.nn.log_softmax(xf, axis=1)
    one_hot = jax.nn.one_hot(targets, NUM_CLASSES, dtype=jnp.float32)
    smooth = (1.0 - EPSILON) * one_hot + EPSILON / NUM_CLASSES
    ref = jnp.sum(jnp.mean(-smooth * log_probs, axis=0))

    # Explicit small tile (multi-step grid + ragged final block).
    loss = cross_entropy_label_smooth(
        logits, targets, num_classes=NUM_CLASSES, epsilon=EPSILON, tile_n=TILE_N)
    jax.block_until_ready(loss)
    assert jnp.allclose(loss, ref, atol=2e-5, rtol=2e-5), (loss, ref)

    # Auto-sized tile path (what production shapes would use).
    loss_auto = cross_entropy_label_smooth(
        logits, targets, num_classes=NUM_CLASSES, epsilon=EPSILON)
    jax.block_until_ready(loss_auto)
    assert jnp.allclose(loss_auto, ref, atol=2e-5, rtol=2e-5), (loss_auto, ref)

    print("KERNEL_OK")
</pallas_src>

<mosaic_0001>
module attributes {stable_mosaic.version = 11 : i64} {
  func.func @_ce_label_smooth_kernel(%arg0: i32, %arg1: memref<16x128xbf16, #tpu.memory_space<vmem>>, %arg2: memref<16x1xi32, #tpu.memory_space<vmem>>, %arg3: memref<16x1xf32, #tpu.memory_space<vmem>>) attributes {dimension_semantics = [#tpu.dimension_semantics<parallel>], iteration_bounds = array<i64: 3>, scalar_prefetch = 0 : i64, scratch_operands = 0 : i64, tpu.core_type = #tpu.core_type<tc>, window_params = [{transform_indices = @transform_0, window_bounds = array<i64: 16, 128>}, {transform_indices = @transform_1, window_bounds = array<i64: 16, 1>}, {transform_indices = @transform_2, window_bounds = array<i64: 16, 1>}]} {
    %c0 = arith.constant 0 : index
    %c0_0 = arith.constant 0 : index
    %0 = vector.load %arg1[%c0, %c0_0] : memref<16x128xbf16, #tpu.memory_space<vmem>>, vector<16x128xbf16>
    %1 = arith.extf %0 : vector<16x128xbf16> to vector<16x128xf32>
    %cst = arith.constant dense<0xFF800000> : vector<16xf32>
    %2 = vector.multi_reduction <maximumf>, %1, %cst [1] : vector<16x128xf32> to vector<16xf32>
    %3 = vector.shape_cast %2 : vector<16xf32> to vector<16x1xf32>
    %4 = vector.broadcast %3 : vector<16x1xf32> to vector<16x128xf32>
    %5 = arith.subf %1, %4 : vector<16x128xf32>
    %6 = math.exp %5 : vector<16x128xf32>
    %cst_1 = arith.constant dense<0.000000e+00> : vector<16xf32>
    %7 = vector.multi_reduction <add>, %6, %cst_1 [1] : vector<16x128xf32> to vector<16xf32>
    %8 = vector.shape_cast %7 : vector<16xf32> to vector<16x1xf32>
    %9 = math.log %8 : vector<16x1xf32>
    %c0_2 = arith.constant 0 : index
    %c0_3 = arith.constant 0 : index
    %10 = vector.load %arg2[%c0_2, %c0_3] : memref<16x1xi32, #tpu.memory_space<vmem>>, vector<16x1xi32>
    %11 = tpu.iota {dimensions = array<i32: 1>} : vector<16x128xi32>
    %cst_4 = arith.constant 0.899999976 : f32
    %cst_5 = arith.constant 7.812500e-04 : f32
    %12 = arith.addf %cst_4, %cst_5 : f32
    %13 = vector.broadcast %10 : vector<16x1xi32> to vector<16x128xi32>
    %14 = arith.cmpi eq, %11, %13 : vector<16x128xi32>
    %cst_6 = arith.constant 7.812500e-04 : f32
    %15 = vector.broadcast %12 : f32 to vector<16x128xf32>
    %16 = vector.broadcast %cst_6 : f32 to vector<16x128xf32>
    %17 = arith.select %14, %15, %16 : vector<16x128xi1>, vector<16x128xf32>
    %18 = arith.mulf %5, %17 : vector<16x128xf32>
    %cst_7 = arith.constant dense<0.000000e+00> : vector<16xf32>
    %19 = vector.multi_reduction <add>, %18, %cst_7 [1] : vector<16x128xf32> to vector<16xf32>
    %20 = vector.shape_cast %19 : vector<16xf32> to vector<16x1xf32>
    %21 = arith.subf %9, %20 : vector<16x1xf32>
    %c0_8 = arith.constant 0 : index
    %c0_9 = arith.constant 0 : index
    %22 = vector.load %arg3[%c0_8, %c0_9] : memref<16x1xf32, #tpu.memory_space<vmem>>, vector<16x1xf32>
    tpu.vector_store %arg3[%c0_8, %c0_9], %21 {strides = array<i32>} : memref<16x1xf32, #tpu.memory_space<vmem>>, vector<16x1xf32>,
    return
  }
  func.func @transform_0(%arg0: i32) -> (i32, i32) {
    %c0_i32 = arith.constant 0 : i32
    %c0_i32_0 = arith.constant 0 : i32
    return %arg0, %c0_i32 : i32, i32
  }
  func.func @transform_1(%arg0: i32) -> (i32, i32) {
    %c0_i32 = arith.constant 0 : i32
    %c0_i32_0 = arith.constant 0 : i32
    return %arg0, %c0_i32 : i32, i32
  }
  func.func @transform_2(%arg0: i32) -> (i32, i32) {
    %c0_i32 = arith.constant 0 : i32
    %c0_i32_0 = arith.constant 0 : i32
    return %arg0, %c0_i32 : i32, i32
  }
}

</mosaic_0001>

<llo_original>
// kernel: tpu_custom_call.1
$region0: #{tpu_custom_call.1}
  #allocation0 [shape = 'u32[]', space=smem, size = 0x4, offset = 0x4, fixed_abs, tag = 'smem constant byte address 0x4 - core index']
  #allocation1 [shape = 'u32[144,128]{1,0:T(1,128)}', space=vmem, size = 0x12000, scoped, tag = 'internal scratch']
  %s0 = inlined_call_operand.vmem [shape: bf16[40,128], index: 0, kind: input, shape index: {}]
  %s1 = inlined_call_operand.vmem [shape: s32[40,1], index: 1, kind: input, shape index: {}]
  %s2 = inlined_call_operand.vmem [shape: f32[40,1], index: 2, kind: output, shape index: {}]
  %s3 = sld [smem:[#allocation0]]
  $region89: #{tpu_custom_call.1} parent=0
    _
  %s5 = ssub.s32 1, %s3
  %s6 = scalar_select 0, %s5, %s3
  $region1: #{tpu_custom_call.1} parent=0
    #allocation2 [shape = 'u8[16384]{0}', space=vmem, size = 0x4000, scoped, tag = 'output window, operand 0']
    loop: start=0, step=1, limit=5
    $region2: #{tpu_custom_call.1} parent=1 // loop_pre_header
      _
    $region3: #{tpu_custom_call.1} parent=1 // loop_header
      %s8 = sphi 0, %s12
      %p9 = scmp.ge.s32.totalorder %s8, 5
      %s18 = sphi 0, %s20
      %s21 = sphi 0, %s18
      %s22 = sphi 0, %s21
      %s38 = sphi 0, %s22
      %s44 = sphi 0, %s46
      %s47 = sphi 0, %s44
      %s48 = sphi 0, %s47
      %s64 = sphi 0, %s48
      %s70 = sphi 0, %s72
      %s73 = sphi 0, %s70
      %s74 = sphi 0, %s73
      %s90 = sphi 0, %s74
    $region4: #{tpu_custom_call.1} parent=1 // loop_header_branch
      %11 = sbr.rel (%p9) target = $region8
    $region5: #{tpu_custom_call.1} parent=1 // loop_body
      %s13 = ssub.s32 %s8, 1
      %s14 = ssub.s32 %s8, 2
      %s15 = sadd.s32 %s8, 1
      %s16 = ssub.s32 %s8, %s15
      %p17 = scmp.eq.s32.totalorder %s16, 0
      %s19 = sadd.s32 %s18, 1
      %s20 = scalar_select %p17, %s18, %s19
      %p23 = pneg %p17
      %p24 = scmp.eq.s32.totalorder %s8, 2
      %p25 = por %p23, %p24
      %p26 = scmp.ne.s32.totalorder %s18, %s21
      %p27 = scmp.eq.s32.totalorder %s8, 0
      %p28 = por %p26, %p27
      %p29 = scmp.ne.s32.totalorder %s18, %s21
      %p30 = scmp.eq.s32.totalorder %s13, 2
      %p31 = por %p29, %p30
      %p32 = scmp.ne.s32.totalorder %s21, %s22
      %p33 = scmp.eq.s32.totalorder %s13, 0
      %p34 = por %p32, %p33
      %p35 = scmp.ne.s32.totalorder %s21, %s22
      %p36 = scmp.eq.s32.totalorder %s14, 2
      %p37 = por %p35, %p36
      %p39 = scmp.ne.s32.totalorder %s22, %s38
      %p40 = scmp.eq.s32.totalorder %s14, 0
      %p41 = por %p39, %p40
      %s42 = ssub.s32 %s8, %s15
      %p43 = scmp.eq.s32.totalorder %s42, 0
      %s45 = sadd.s32 %s44, 1
      %s46 = scalar_select %p43, %s44, %s45
      %p49 = pneg %p43
      %p50 = scmp.eq.s32.totalorder %s8, 2
      %p51 = por %p49, %p50
      %p52 = scmp.ne.s32.totalorder %s44, %s47
      %p53 = scmp.eq.s32.totalorder %s8, 0
      %p54 = por %p52, %p53
      %p55 = scmp.ne.s32.totalorder %s44, %s47
      %p56 = scmp.eq.s32.totalorder %s13, 2
      %p57 = por %p55, %p56
      %p58 = scmp.ne.s32.totalorder %s47, %s48
      %p59 = scmp.eq.s32.totalorder %s13, 0
      %p60 = por %p58, %p59
      %p61 = scmp.ne.s32.totalorder %s47, %s48
      %p62 = scmp.eq.s32.totalorder %s14, 2
      %p63 = por %p61, %p62
      %p65 = scmp.ne.s32.totalorder %s48, %s64
      %p66 = scmp.eq.s32.totalorder %s14, 0
      %p67 = por %p65, %p66
      %s68 = ssub.s32 %s8, %s15
      %p69 = scmp.eq.s32.totalorder %s68, 0
      %s71 = sadd.s32 %s70, 1
      %s72 = scalar_select %p69, %s70, %s71
      %p75 = pneg %p69
      %p76 = scmp.eq.s32.totalorder %s8, 2
      %p77 = por %p75, %p76
      %p78 = scmp.ne.s32.totalorder %s70, %s73
      %p79 = scmp.eq.s32.totalorder %s8, 0
      %p80 = por %p78, %p79
      %p81 = scmp.ne.s32.totalorder %s70, %s73
      %p82 = scmp.eq.s32.totalorder %s13, 2
      %p83 = por %p81, %p82
      %p84 = scmp.ne.s32.totalorder %s73, %s74
      %p85 = scmp.eq.s32.totalorder %s13, 0
      %p86 = por %p84, %p85
      %p87 = scmp.ne.s32.totalorder %s73, %s74
      %p88 = scmp.eq.s32.totalorder %s14, 2
      %p89 = por %p87, %p88
      %p91 = scmp.ne.s32.totalorder %s74, %s90
      %p92 = scmp.eq.s32.totalorder %s14, 0
      %p93 = por %p91, %p92
      %p94 = scmp.le.s32.totalorder 1, %s8
      %p95 = scmp.lt.s32.totalorder %s8, 4
      %p96 = pnand %p94, %p95
      %p97 = pneg %p96
      // Predicated region
      $region9: #{tpu_custom_call.1} parent=5 // pred_check
        _
      $region10: #{tpu_custom_call.1} parent=5 // pred_check_branch
        %99 = sbr.rel (%p96) target = $region12
      $region11: #{tpu_custom_call.1} parent=5 // pred_region
        %s100 = ssub.s32 %s8, 1
      $region12: #{tpu_custom_call.1} parent=5 // pred_fallthru
        _
      %p101 = scmp.lt.s32.totalorder %s8, 3
      // Predicated region
      $region13: #{tpu_custom_call.1} parent=5 // pred_check
        %p102 = pneg %p101
      $region14: #{tpu_custom_call.1} parent=5 // pred_check_branch
        %104 = sbr.rel (%p102) target = $region16
      $region15: #{tpu_custom_call.1} parent=5 // pred_region
        // Predicated region
        $region17: #{tpu_custom_call.1} parent=15 // pred_check
          %p105 = pneg %p28
        $region18: #{tpu_custom_call.1} parent=15 // pred_check_branch
          %107 = sbr.rel (%p105) target = $region20
        $region19: #{tpu_custom_call.1} parent=15 // pred_region
          %s108 = smul.u32 2, %s8
          %s109 = ssub.s32 5, %s108
          %p110 = scmp.lt.s32.totalorder %s109, 2
          %s111 = scalar_select %p110, %s109, 2
          %s112 = smul.u32 64, %s111
          %p113 = scmp.lt.s32.totalorder %s108, 4
          %s114 = scalar_select %p113, %s108, 4
          %s115 = smul.addr %s114, 4
          %s116 = scalar_lea.vmem %s0, %s115
          %s117 = smul.u32 2, %s8
          %s118 = ssub.s32 5, %s117
          %p119 = scmp.lt.s32.totalorder %s118, 2
          %s120 = scalar_select %p119, %s118, 2
          %s121 = smul.u32 64, %s120
        $region20: #{tpu_custom_call.1} parent=15 // pred_fallthru
          _
        // Predicated region
        $region21: #{tpu_custom_call.1} parent=15 // pred_check
          %p122 = pneg %p54
        $region22: #{tpu_custom_call.1} parent=15 // pred_check_branch
          %124 = sbr.rel (%p122) target = $region24
        $region23: #{tpu_custom_call.1} parent=15 // pred_region
          %s125 = smul.u32 2, %s8
          %s126 = ssub.s32 5, %s125
          %p127 = scmp.lt.s32.totalorder %s126, 2
          %s128 = scalar_select %p127, %s126, 2
          %s129 = smul.u32 128, %s128
          %p130 = scmp.lt.s32.totalorder %s125, 4
          %s131 = scalar_select %p130, %s125, 4
          %s132 = smul.addr %s131, 8
          %s133 = scalar_lea.vmem %s1, %s132
          %s134 = smul.u32 2, %s8
          %s135 = ssub.s32 5, %s134
          %p136 = scmp.lt.s32.totalorder %s135, 2
          %s137 = scalar_select %p136, %s135, 2
          %s138 = smul.u32 128, %s137
        $region24: #{tpu_custom_call.1} parent=15 // pred_fallthru
          _
      $region16: #{tpu_custom_call.1} parent=5 // pred_fallthru
        _
      %p139 = scmp.le.s32.totalorder 1, %s8
      %p140 = scmp.lt.s32.totalorder %s8, 4
      %p141 = pnand %p139, %p140
      %p142 = pneg %p141
      // Predicated region
      $region25: #{tpu_custom_call.1} parent=5 // pred_check
        _
      $region26: #{tpu_custom_call.1} parent=5 // pred_check_branch
        %144 = sbr.rel (%p141) target = $region28
      $region27: #{tpu_custom_call.1} parent=5 // pred_region
        %s145 = ssub.s32 %s8, 1
        %s146 = smul.u32 2, %s13
        %s147 = ssub.s32 5, %s146
        %p148 = scmp.lt.s32.totalorder %s147, 2
        %s149 = scalar_select %p148, %s147, 2
        %s150 = smul.u32 64, %s149
        %p151 = scmp.lt.s32.totalorder %s146, 4
        %s152 = scalar_select %p151, %s146, 4
        %s153 = smul.addr %s152, 4
        %s154 = scalar_lea.vmem %s0, %s153
        %p155 = pneg %p34
        %p156 = pneg %p31
        %s157 = smul.u32 2, %s13
        %s158 = ssub.s32 5, %s157
        %p159 = scmp.lt.s32.totalorder %s158, 2
        %s160 = scalar_select %p159, %s158, 2
        %s161 = smul.u32 128, %s160
        %p162 = scmp.lt.s32.totalorder %s157, 4
        %s163 = scalar_select %p162, %s157, 4
        %s164 = smul.addr %s163, 8
        %s165 = scalar_lea.vmem %s1, %s164
        %p166 = pneg %p60
        %p167 = pneg %p57
        %p168 = pneg %p86
        %p169 = pneg %p83
        %s170 = sand.u32 %s73, 1
        %s171 = sand.u32 %s73, 1
        %s172 = smul.addr %s171, 16
        %s173 = scalar_lea.vmem [#allocation2], %s172
        %s174 = smul.u32 2, %s13
        %s175 = ssub.s32 5, %s174
        %p176 = scmp.lt.s32.totalorder %s175, 2
        %s177 = scalar_select %p176, %s175, 2
        %s178 = smul.u32 64, %s177
        %p179 = scmp.lt.s32.totalorder %s174, 4
        %s180 = scalar_select %p179, %s174, 4
        %s181 = smul.addr %s180, 4
        %s182 = scalar_lea.vmem %s0, %s181
        %s183 = smul.u32 2, %s13
        %s184 = ssub.s32 5, %s183
        %p185 = scmp.lt.s32.totalorder %s184, 2
        %s186 = scalar_select %p185, %s184, 2
        %s187 = smul.u32 64, %s186
        %s188 = smul.u32 2, %s13
        %s189 = ssub.s32 5, %s188
        %p190 = scmp.lt.s32.totalorder %s189, 2
        %s191 = scalar_select %p190, %s189, 2
        %s192 = smul.u32 128, %s191
        %p193 = scmp.lt.s32.totalorder %s188, 4
        %s194 = scalar_select %p193, %s188, 4
        %s195 = smul.addr %s194, 8
        %s196 = scalar_lea.vmem %s1, %s195
        %s197 = smul.u32 2, %s13
        %s198 = ssub.s32 5, %s197
        %p199 = scmp.lt.s32.totalorder %s198, 2
        %s200 = scalar_select %p199, %s198, 2
        %s201 = smul.u32 128, %s200
        %s202 = smul.u32 2, %s13
        %s203 = ssub.s32 5, %s202
        %p204 = scmp.lt.s32.totalorder %s203, 2
        %s205 = scalar_select %p204, %s203, 2
        %s206 = smul.u32 128, %s205
        %v207 = vld [vmem:[%s182] sm:$0xf]
        %v208 = vld [vmem:[%s182 + $0x4] sm:$0xf]
        %v209 = vunpack.c.l.bf16 %v207
        %v210 = vunpack.c.l.bf16 %v208
        %211 = vmax.xlane.f32.xlu0 %v209
        %v212 = vpop.xlane.xlu0 %211
        %213 = vmax.xlane.f32.xlu0 %v210
        %v214 = vpop.xlane.xlu0 %213
        %v215 = vsub.f32 %v209, %v212
        %v216 = vsub.f32 %v210, %v214
        %v217 = vmul.f32 %v215, 1.442695
        %v218 = vpow.pop %v217
        %v219 = vmul.f32 %v216, 1.442695
        %v220 = vpow.pop %v219
        %221 = vadd.xlane.f32.xlu0 %v218
        %v222 = vpop.xlane.xlu0 %221
        %223 = vadd.xlane.f32.xlu0 %v220
        %v224 = vpop.xlane.xlu0 %223
        %v225 = vlog2.pop %v222
        %v226 = vmul.f32 %v225, 0.6931472
        %v227 = vlog2.pop %v224
        %v228 = vmul.f32 %v227, 0.6931472
        %v229 = vld [vmem:[%s196] sm:$0xff]
        %v230 = vld [vmem:[%s196 + $0x8] sm:$0xff]
        %v231 = vlaneseq
        %v232 = vand.u32 %v231, 127
        %233 = vset.pattern.permute.xlu0 0
        %234 = vperm.xlu0 %233, %v229
        %v235 = vpop.permute.xlu0 %234
        %236 = vset.pattern.permute.xlu0 0
        %237 = vperm.xlu0 %236, %v230
        %v238 = vpop.permute.xlu0 %237
        %vm239 = vcmp.eq.s32.totalorder %v232, %v235
        %vm240 = vcmp.eq.s32.totalorder %v232, %v238
        %v241 = vsel %vm239, 0.9007812, 0.00078125
        %v242 = vsel %vm240, 0.9007812, 0.00078125
        %v243 = vmul.f32 %v215, %v241
        %v244 = vmul.f32 %v216, %v242
        %245 = vadd.xlane.f32.xlu0 %v243
        %v246 = vpop.xlane.xlu0 %245
        %247 = vadd.xlane.f32.xlu0 %v244
        %v248 = vpop.xlane.xlu0 %247
        %v249 = vsub.f32 %v226, %v246
        %v250 = vsub.f32 %v228, %v248
        %vm251 = vcmask 7168
        %252 = vst.msk [vmem:[%s173] sm:$0xff] %vm251, %v249
        %253 = vst.msk [vmem:[%s173 + $0x8] sm:$0xff] %vm251, %v250
        %s254 = sand.u32 %s73, 1
        %s255 = sand.u32 %s73, 1
        %s256 = smul.addr %s255, 16
        %s257 = scalar_lea.vmem [#allocation2], %s256
        // Predicated region
        $region29: #{tpu_custom_call.1} parent=27 // pred_check
          %p258 = pneg %p83
        $region30: #{tpu_custom_call.1} parent=27 // pred_check_branch
          %260 = sbr.rel (%p258) target = $region32
        $region31: #{tpu_custom_call.1} parent=27 // pred_region
          %s261 = smul.u32 2, %s13
          %s262 = ssub.s32 5, %s261
          %p263 = scmp.lt.s32.totalorder %s262, 2
          %s264 = scalar_select %p263, %s262, 2
          %s265 = smul.u32 128, %s264
          %p266 = scmp.ne.s32.totalorder 0, %s265
          %s267 = smul.addr %s261, 8
          %s268 = scalar_lea.vmem %s2, %s267
          // Predicated region
          $region33: #{tpu_custom_call.1} parent=31 // pred_check
            %p269 = pneg %p266
          $region34: #{tpu_custom_call.1} parent=31 // pred_check_branch
            %271 = sbr.rel (%p269) target = $region36
          $region35: #{tpu_custom_call.1} parent=31 // pred_region
            // Predicated region
            $region37: #{tpu_custom_call.1} parent=35 // pred_check
              _
            $region38: #{tpu_custom_call.1} parent=35 // pred_check_branch
              %273 = sbr.rel (0) target = $region40
            $region39: #{tpu_custom_call.1} parent=35 // pred_region
              // Predicated region
              $region59: #{tpu_custom_call.1} parent=39 // pred_check
                _
              $region60: #{tpu_custom_call.1} parent=39 // pred_check_branch
                %325 = sbr.rel (0) target = $region62
              $region61: #{tpu_custom_call.1} parent=39 // pred_region
                %s326 = sshrl.u32 %s264, 1
                // While loop
                $region63: #{tpu_custom_call.1} parent=61 // loop_pre_header
                  _
                $region64: #{tpu_custom_call.1} parent=61 // loop_header
                  %s328 = sphi 0, %s330
                  %p329 = scmp.ge.s32.totalorder %s328, %s326
                  %s333 = sphi 0, %s342
                  %s334 = sphi %s257, %s345
                  %s335 = sphi %s268, %s346
                $region65: #{tpu_custom_call.1} parent=61 // loop_header_branch
                  %332 = sbr.rel (%p329) target = $region69
                $region66: #{tpu_custom_call.1} parent=61 // loop_body
                  %v336 = vld [vmem:[%s334] sm:$0xff]
                  %337 = vst [vmem:[%s335] sm:$0xff] %v336
                  %v338 = vld [vmem:[%s334 + $0x8] sm:$0xff]
                  %339 = vst [vmem:[%s335 + $0x8] sm:$0xff] %v338
                  %s340 = sadd.s32 1, %s333
                  %p341 = scmp.ge.s32.totalorder %s340, %s326
                  %s342 = scalar_select %p341, 0, %s340
                  %s343 = smul.u32 %s342, 16
                  %s344 = smul.u32 %s342, 16
                  %s345 = scalar_lea.vmem %s257, %s343 [#allocation2]
                  %s346 = scalar_lea.vmem %s268, %s344
                $region67: #{tpu_custom_call.1} parent=61 // loop_footer
                  %s330 = sadd.s32 %s328, 1
                $region68: #{tpu_custom_call.1} parent=61 // loop_footer_branch
                  %327 = sbr.rel target = $region64
                $region69: #{tpu_custom_call.1} parent=61 // loop_exit
                  _
                %s347 = sshrl.u32 %s264, 1
                %s348 = sand.u32 %s264, 1
                %s349 = smul.u32 %s347, 2
                %s350 = smul.u32 8, %s349
                %s351 = scalar_lea.vmem %s257, %s350 [#allocation2]
                %s352 = smul.u32 8, %s349
                %s353 = scalar_lea.vmem %s268, %s352
                // While loop
                $region70: #{tpu_custom_call.1} parent=61 // loop_pre_header
                  _
                $region71: #{tpu_custom_call.1} parent=61 // loop_header
                  %s355 = sphi 0, %s357
                  %p356 = scmp.ge.s32.totalorder %s355, %s348
                  %s360 = sphi 0, %s367
                  %s361 = sphi %s351, %s370
                  %s362 = sphi %s353, %s371
                $region72: #{tpu_custom_call.1} parent=61 // loop_header_branch
                  %359 = sbr.rel (%p356) target = $region76
                $region73: #{tpu_custom_call.1} parent=61 // loop_body
                  %v363 = vld [vmem:[%s361] sm:$0xff]
                  %364 = vst [vmem:[%s362] sm:$0xff] %v363
                  %s365 = sadd.s32 1, %s360
                  %p366 = scmp.ge.s32.totalorder %s365, %s348
                  %s367 = scalar_select %p366, 0, %s365
                  %s368 = smul.u32 %s367, 8
                  %s369 = smul.u32 %s367, 8
                  %s370 = scalar_lea.vmem %s351, %s368 [#allocation2]
                  %s371 = scalar_lea.vmem %s353, %s369
                $region74: #{tpu_custom_call.1} parent=61 // loop_footer
                  %s357 = sadd.s32 %s355, 1
                $region75: #{tpu_custom_call.1} parent=61 // loop_footer_branch
                  %354 = sbr.rel target = $region71
                $region76: #{tpu_custom_call.1} parent=61 // loop_exit
                  _
              $region62: #{tpu_custom_call.1} parent=39 // pred_fallthru
                _
              // Predicated region
              $region77: #{tpu_custom_call.1} parent=39 // pred_check
                _
              $region78: #{tpu_custom_call.1} parent=39 // pred_check_branch
                %373 = sbr.rel target = $region80
              $region79: #{tpu_custom_call.1} parent=39 // pred_region
                _
              $region80: #{tpu_custom_call.1} parent=39 // pred_fallthru
                _
            $region40: #{tpu_custom_call.1} parent=35 // pred_fallthru
              _
            // Predicated region
            $region41: #{tpu_custom_call.1} parent=35 // pred_check
              _
            $region42: #{tpu_custom_call.1} parent=35 // pred_check_branch
              %275 = sbr.rel target = $region44
            $region43: #{tpu_custom_call.1} parent=35 // pred_region
              %s277 = ssub.s32 256, 1
              %s278 = sshrl.u32 %s264, 1
              // While loop
              $region45: #{tpu_custom_call.1} parent=43 // loop_pre_header
                _
              $region46: #{tpu_custom_call.1} parent=43 // loop_header
                %s280 = sphi 0, %s282
                %p281 = scmp.ge.s32.totalorder %s280, %s278
                %s285 = sphi 0, %s294
                %s286 = sphi %s257, %s297
                %s287 = sphi %s268, %s298
              $region47: #{tpu_custom_call.1} parent=43 // loop_header_branch
                %284 = sbr.rel (%p281) target = $region51
              $region48: #{tpu_custom_call.1} parent=43 // loop_body
                %v288 = vld [vmem:[%s286] sm:%s277]
                %289 = vst [vmem:[%s287] sm:%s277] %v288
                %v290 = vld [vmem:[%s286 + $0x8] sm:%s277]
                %291 = vst [vmem:[%s287 + $0x8] sm:%s277] %v290
                %s292 = sadd.s32 1, %s285
                %p293 = scmp.ge.s32.totalorder %s292, %s278
                %s294 = scalar_select %p293, 0, %s292
                %s295 = smul.u32 %s294, 16
                %s296 = smul.u32 %s294, 16
                %s297 = scalar_lea.vmem %s257, %s295 [#allocation2]
                %s298 = scalar_lea.vmem %s268, %s296
              $region49: #{tpu_custom_call.1} parent=43 // loop_footer
                %s282 = sadd.s32 %s280, 1
              $region50: #{tpu_custom_call.1} parent=43 // loop_footer_branch
                %279 = sbr.rel target = $region46
              $region51: #{tpu_custom_call.1} parent=43 // loop_exit
                _
              %s299 = sshrl.u32 %s264, 1
              %s300 = sand.u32 %s264, 1
              %s301 = smul.u32 %s299, 2
              %s302 = smul.u32 8, %s301
              %s303 = scalar_lea.vmem %s257, %s302 [#allocation2]
              %s304 = smul.u32 8, %s301
              %s305 = scalar_lea.vmem %s268, %s304
              // While loop
              $region52: #{tpu_custom_call.1} parent=43 // loop_pre_header
                _
              $region53: #{tpu_custom_call.1} parent=43 // loop_header
                %s307 = sphi 0, %s309
                %p308 = scmp.ge.s32.totalorder %s307, %s300
                %s312 = sphi 0, %s319
                %s313 = sphi %s303, %s322
                %s314 = sphi %s305, %s323
              $region54: #{tpu_custom_call.1} parent=43 // loop_header_branch
                %311 = sbr.rel (%p308) target = $region58
              $region55: #{tpu_custom_call.1} parent=43 // loop_body
                %v315 = vld [vmem:[%s313] sm:%s277]
                %316 = vst [vmem:[%s314] sm:%s277] %v315
                %s317 = sadd.s32 1, %s312
                %p318 = scmp.ge.s32.totalorder %s317, %s300
                %s319 = scalar_select %p318, 0, %s317
                %s320 = smul.u32 %s319, 8
                %s321 = smul.u32 %s319, 8
                %s322 = scalar_lea.vmem %s303, %s320 [#allocation2]
                %s323 = scalar_lea.vmem %s305, %s321
              $region56: #{tpu_custom_call.1} parent=43 // loop_footer
                %s309 = sadd.s32 %s307, 1
              $region57: #{tpu_custom_call.1} parent=43 // loop_footer_branch
                %306 = sbr.rel target = $region53
              $region58: #{tpu_custom_call.1} parent=43 // loop_exit
                _
            $region44: #{tpu_custom_call.1} parent=35 // pred_fallthru
              _
          $region36: #{tpu_custom_call.1} parent=31 // pred_fallthru
            _
          %374 = vnop
        $region32: #{tpu_custom_call.1} parent=27 // pred_fallthru
          _
      $region28: #{tpu_custom_call.1} parent=5 // pred_fallthru
        _
      %p375 = scmp.le.s32.totalorder 2, %s8
      // Predicated region
      $region81: #{tpu_custom_call.1} parent=5 // pred_check
        %p376 = pneg %p375
      $region82: #{tpu_custom_call.1} parent=5 // pred_check_branch
        %378 = sbr.rel (%p376) target = $region84
      $region83: #{tpu_custom_call.1} parent=5 // pred_region
        %s379 = ssub.s32 %s8, 2
        // Predicated region
        $region85: #{tpu_custom_call.1} parent=83 // pred_check
          %p380 = pneg %p89
        $region86: #{tpu_custom_call.1} parent=83 // pred_check_branch
          %382 = sbr.rel (%p380) target = $region88
        $region87: #{tpu_custom_call.1} parent=83 // pred_region
          %s383 = sand.u32 %s74, 1
          %s384 = sand.u32 %s74, 1
          %s385 = smul.addr %s384, 16
          %s386 = scalar_lea.vmem [#allocation2], %s385
        $region88: #{tpu_custom_call.1} parent=83 // pred_fallthru
          _
      $region84: #{tpu_custom_call.1} parent=5 // pred_fallthru
        _
    $region6: #{tpu_custom_call.1} parent=1 // loop_footer
      %s12 = sadd.s32 1, %s8
    $region7: #{tpu_custom_call.1} parent=1 // loop_footer_branch
      %7 = sbr.rel target = $region3
    $region8: #{tpu_custom_call.1} parent=1 // loop_exit
      _

</llo_original>
